<compile_context>
chip_gen: v7x
topology: tpu7x:2x2x1
jax: 0.10.0
libtpu: 0.0.40
codegen_flags: <defaults>
</compile_context>

<pallas_src>
import functools

import jax
import jax.numpy as jnp
import numpy as np
from jax.experimental import pallas as pl
from jax.experimental.pallas import tpu as pltpu


def _build_prompt_kernel(prefix_ref, ctx_ref, suffix_ref, out_ref, *, n_ctx, d):
    # prefix_ref: (c_blk, n_p, D)          per-class, per-variant prefix token
    # ctx_ref:    (n_p, n_ctx*D)           full ctx, VMEM-resident (constant index_map)
    # suffix_ref: (c_blk, P_suf, S_suf*D)  per-class suffix tokens, P_suf in {1, n_p}
    # out_ref:    (c_blk, n_p, L*D)        L = 1 + n_ctx + S_suf
    # Segment lane offsets 0, D, (1+n_ctx)*D are multiples of D -> lane-aligned
    # (unmasked vst) whenever D % 128 == 0.
    c_blk, n_p, _ = out_ref.shape
    p_suf = suffix_ref.shape[1]
    ctx_lo = d
    ctx_hi = (1 + n_ctx) * d

    # Segment 1: prefix token (pre-broadcast to P == n_p in the wrapper; tiny).
    out_ref[:, :, 0:d] = prefix_ref[...]

    # Segment 2: ctx. Keep the (n_p, n_ctx*D) tile resident in a few vregs and
    # store it once per class row -> no c_blk-wide broadcast materialization.
    ctx = ctx_ref[...].reshape(1, n_p, n_ctx * d)

    @pl.loop(0, c_blk)
    def _(i):
        out_ref[pl.ds(i, 1), :, ctx_lo:ctx_hi] = ctx

    # Segment 3: suffix (bulk of the row) - straight tile-to-tile copies.
    if p_suf == n_p:
        out_ref[:, :, ctx_hi:] = suffix_ref[...]
    else:
        # Variant-shared suffix (P == 1): replicate across the variant rows.
        for p in range(n_p):
            out_ref[:, p:p + 1, ctx_hi:] = suffix_ref[:, 0:1, :]


def nega_prompt_forward(ctx_positive, ctx_negative, token_prefix, token_suffix,
                        *, class_block=64, vmem_budget_bytes=44 * 1024 * 1024):
    """Reproduces NegaPromptLearner.forward(modify_to_ori=None), generic-ctx path.

    ctx_positive: (1, n_ctx, D)
    ctx_negative: (n_nega_ctx, n_ctx_neg, D) with n_ctx_neg <= n_ctx, or empty
    token_prefix: (n_cls, P, 1, D)      P in {1, 1 + n_nega_ctx}
    token_suffix: (n_cls, P, S_suf, D)  (P == 1 means "shared across variants")
    returns prompts: (n_cls, 1 + n_nega_ctx, 1 + n_ctx + S_suf, D)
    """
    # TODO(synk): class-specific contexts (CSC, 4-D ctx_positive) and the
    # modify_to_ori host-dict relabeling (a plain row gather) stay in JAX.
    n_ctx = ctx_positive.shape[1]
    d = ctx_positive.shape[-1]
    out_dtype = token_prefix.dtype

    # ---- parameter assembly (tiny, plain JAX glue) ----
    if ctx_negative.ndim != 3 or ctx_negative.shape[0] == 0:
        ctx = ctx_positive
    else:
        diff = n_ctx - ctx_negative.shape[1]
        if diff < 0:
            raise ValueError(
                f"ctx_negative has more context tokens ({ctx_negative.shape[1]}) "
                f"than ctx_positive ({n_ctx}); unsupported (matches torch module).")
        if diff > 0:
            pad = jnp.zeros((ctx_negative.shape[0], diff, d), ctx_negative.dtype)
            ctx_negative = jnp.concatenate([pad, ctx_negative], axis=1)
        ctx = jnp.concatenate([ctx_positive, ctx_negative], axis=0)
    ctx = ctx.astype(out_dtype)                     # pre-cast: no per-step cast in kernel
    n_p = ctx.shape[0]                              # 1 + n_nega_ctx

    n_cls, p_pre = token_prefix.shape[0], token_prefix.shape[1]
    p_suf, s_suf = token_suffix.shape[1], token_suffix.shape[2]
    assert p_pre in (1, n_p) and p_suf in (1, n_p)
    assert s_suf >= 1
    seq_len = 1 + n_ctx + s_suf

    # Prefix is a single token per row: pre-broadcast a variant-shared layout
    # (negligible bytes) so the in-kernel prefix store is one dense assignment.
    if p_pre == 1 and n_p > 1:
        token_prefix = jnp.broadcast_to(token_prefix, (n_cls, n_p, 1, d))
    token_suffix = token_suffix.astype(out_dtype)

    # ---- class blocking: largest block whose double-buffered set fits budget ----
    item = jnp.dtype(out_dtype).itemsize

    def working_set(cb):
        out_blk = cb * n_p * seq_len * d * item
        suf_blk = cb * p_suf * s_suf * d * item
        pre_blk = cb * n_p * d * item
        ctx_blk = n_p * n_ctx * d * item
        return 2 * (out_blk + suf_blk + pre_blk + ctx_blk)

    c_blk = max(1, min(class_block, n_cls))
    while c_blk > 8 and working_set(c_blk) > vmem_budget_bytes:
        c_blk = max(8, c_blk // 2)

    # Pad the class axis up to a multiple of c_blk (instead of degrading to a
    # tiny divisor block); padded rows are sliced off after the call.
    n_cls_pad = -(-n_cls // c_blk) * c_blk
    if n_cls_pad != n_cls:
        pad_rows = n_cls_pad - n_cls
        token_prefix = jnp.pad(token_prefix, ((0, pad_rows), (0, 0), (0, 0), (0, 0)))
        token_suffix = jnp.pad(token_suffix, ((0, pad_rows), (0, 0), (0, 0), (0, 0)))

    # ---- lane-dense flattening (metadata-only reshapes) ----
    prefix_flat = token_prefix.reshape(n_cls_pad, n_p, d)
    suffix_flat = token_suffix.reshape(n_cls_pad, p_suf, s_suf * d)
    ctx_flat = ctx.reshape(n_p, n_ctx * d)

    grid = (n_cls_pad // c_blk,)
    vmem_limit = int(min(max(working_set(c_blk) + (8 << 20), 32 << 20), 60 << 20))

    kernel = functools.partial(_build_prompt_kernel, n_ctx=n_ctx, d=d)
    prompts_flat = pl.pallas_call(
        kernel,
        out_shape=jax.ShapeDtypeStruct((n_cls_pad, n_p, seq_len * d), out_dtype),
        grid=grid,
        in_specs=[
            pl.BlockSpec((c_blk, n_p, d), lambda c: (c, 0, 0)),
            # Full ctx block with a constant index_map: stays VMEM-resident.
            pl.BlockSpec((n_p, n_ctx * d), lambda c: (0, 0)),
            pl.BlockSpec((c_blk, p_suf, s_suf * d), lambda c: (c, 0, 0)),
        ],
        out_specs=pl.BlockSpec((c_blk, n_p, seq_len * d), lambda c: (c, 0, 0)),
        compiler_params=pltpu.CompilerParams(
            dimension_semantics=("parallel",),
            vmem_limit_bytes=vmem_limit,
        ),
    )(prefix_flat, ctx_flat, suffix_flat)

    prompts = prompts_flat.reshape(n_cls_pad, n_p, seq_len, d)
    if n_cls_pad != n_cls:
        prompts = prompts[:n_cls]
    return prompts


def _reference_forward(ctx_positive, ctx_negative, token_prefix, token_suffix):
    n_cls = token_prefix.shape[0]
    d = ctx_positive.shape[-1]
    if ctx_negative.ndim != 3 or ctx_negative.shape[0] == 0:
        ctx = ctx_positive
    else:
        diff = ctx_positive.shape[1] - ctx_negative.shape[1]
        if diff > 0:
            pad = jnp.zeros((ctx_negative.shape[0], diff, d), ctx_negative.dtype)
            ctx_negative = jnp.concatenate([pad, ctx_negative], axis=1)
        ctx = jnp.concatenate([ctx_positive, ctx_negative], axis=0)
    n_p = ctx.shape[0]
    ctx = jnp.broadcast_to(ctx[None], (n_cls,) + ctx.shape)
    if token_prefix.shape[1] == 1:
        token_prefix = jnp.broadcast_to(
            token_prefix, (n_cls, n_p) + token_prefix.shape[2:])
        token_suffix = jnp.broadcast_to(
            token_suffix, (n_cls, n_p) + token_suffix.shape[2:])
    return jnp.concatenate([token_prefix, ctx.astype(token_prefix.dtype),
                            token_suffix], axis=2)


if __name__ == "__main__":
    # Small synthetic shapes consistent with the module's __init__:
    #   n_cls classes, n_nega_ctx negative contexts, n_ctx context tokens,
    #   total tokenized sequence length L, embedding (ctx) dim D.
    # (Real CLIP: L=77, D=512, bf16/f16. n_cls chosen non-multiple of the class
    #  block to exercise the padding path; class_block=4 forces a 2-step grid.)
    n_cls = 6
    n_nega_ctx = 2
    n_ctx = 4
    seq_len = 16          # CLIP uses 77; small here
    d = 128               # CLIP ctx_dim is 512; lane-friendly small value
    n_p = 1 + n_nega_ctx
    s_suf = seq_len - 1 - n_ctx
    dtype = jnp.float32

    key = jax.random.PRNGKey(0)
    k_ctx_p, k_ctx_n, k_emb = jax.random.split(key, 3)

    # Deterministic synthetic parameters (std=0.02 like nn.init.normal_).
    ctx_positive = (0.02 * jax.random.normal(k_ctx_p, (1, n_ctx, d))).astype(dtype)
    ctx_negative = (0.02 * jax.random.normal(k_ctx_n, (n_nega_ctx, n_ctx, d))).astype(dtype)

    # Synthetic token embedding of the class prompts. Positive and negative
    # prompts share the same text, so the embedding is identical across the
    # (1 + n_nega_ctx) variant axis (matches the .repeat in __init__).
    embedding = jax.random.normal(k_emb, (n_cls, seq_len, d)).astype(dtype)
    embedding = jnp.broadcast_to(embedding[:, None], (n_cls, n_p, seq_len, d))
    token_prefix_full = embedding[:, :, :1, :]            # (n_cls, n_p, 1, D)
    token_suffix_full = embedding[:, :, 1 + n_ctx:, :]    # (n_cls, n_p, S_suf, D)
    # Deduplicated (variant-shared) layout: n_p x less input HBM traffic.
    token_prefix_shared = token_prefix_full[:, :1]        # (n_cls, 1, 1, D)
    token_suffix_shared = token_suffix_full[:, :1]        # (n_cls, 1, S_suf, D)

    prompts_full = nega_prompt_forward(
        ctx_positive, ctx_negative, token_prefix_full, token_suffix_full,
        class_block=4)
    prompts_shared = nega_prompt_forward(
        ctx_positive, ctx_negative, token_prefix_shared, token_suffix_shared,
        class_block=4)
    jax.block_until_ready((prompts_full, prompts_shared))

    ref = _reference_forward(ctx_positive, ctx_negative,
                             token_prefix_full, token_suffix_full)
    np.testing.assert_allclose(np.asarray(prompts_full), np.asarray(ref), rtol=0, atol=0)
    np.testing.assert_allclose(np.asarray(prompts_shared), np.asarray(ref), rtol=0, atol=0)
    assert prompts_full.shape == (n_cls, n_p, seq_len, d)
    assert prompts_shared.shape == (n_cls, n_p, seq_len, d)

    print("KERNEL_OK")
</pallas_src>

<mosaic_0001>
module attributes {stable_mosaic.version = 11 : i64} {
  func.func @_build_prompt_kernel(%arg0: i32, %arg1: memref<4x3x128xf32, #tpu.memory_space<vmem>>, %arg2: memref<3x512xf32, #tpu.memory_space<vmem>>, %arg3: memref<4x3x1408xf32, #tpu.memory_space<vmem>>, %arg4: memref<4x3x2048xf32, #tpu.memory_space<vmem>>) attributes {dimension_semantics = [#tpu.dimension_semantics<parallel>], iteration_bounds = array<i64: 2>, scalar_prefetch = 0 : i64, scratch_operands = 0 : i64, tpu.core_type = #tpu.core_type<tc>, window_params = [{transform_indices = @transform_0, window_bounds = array<i64: 4, 3, 128>}, {pipeline_mode = #tpu.pipeline_mode<synchronous>, transform_indices = @transform_1, window_bounds = array<i64: 3, 512>}, {transform_indices = @transform_2, window_bounds = array<i64: 4, 3, 1408>}, {transform_indices = @transform_3, window_bounds = array<i64: 4, 3, 2048>}]} {
    %c0 = arith.constant 0 : index
    %c0_0 = arith.constant 0 : index
    %c0_1 = arith.constant 0 : index
    %0 = vector.load %arg1[%c0, %c0_0, %c0_1] : memref<4x3x128xf32, #tpu.memory_space<vmem>>, vector<4x3x128xf32>
    %c0_2 = arith.constant 0 : index
    %c0_3 = arith.constant 0 : index
    %c0_4 = arith.constant 0 : index
    %1 = vector.load %arg4[%c0_2, %c0_3, %c0_4] : memref<4x3x2048xf32, #tpu.memory_space<vmem>>, vector<4x3x128xf32>
    tpu.vector_store %arg4[%c0_2, %c0_3, %c0_4], %0 {strides = array<i32>} : memref<4x3x2048xf32, #tpu.memory_space<vmem>>, vector<4x3x128xf32>,
    %c0_5 = arith.constant 0 : index
    %c0_6 = arith.constant 0 : index
    %2 = vector.load %arg2[%c0_5, %c0_6] : memref<3x512xf32, #tpu.memory_space<vmem>>, vector<3x512xf32>
    %3 = vector.shape_cast %2 : vector<3x512xf32> to vector<1x3x512xf32>
    %c0_i32 = arith.constant 0 : i32
    %c4_i32 = arith.constant 4 : i32
    %4 = arith.addi %c0_i32, %c4_i32 : i32
    %c1_i32 = arith.constant 1 : i32
    scf.for %arg5 = %c0_i32 to %4 step %c1_i32  : i32 {
      %c1_i32_13 = arith.constant 1 : i32
      %7 = arith.muli %arg5, %c1_i32_13 : i32
      %c0_i32_14 = arith.constant 0 : i32
      %8 = arith.addi %c0_i32_14, %7 : i32
      %9 = arith.index_cast %8 : i32 to index
      %c0_15 = arith.constant 0 : index
      %c128 = arith.constant 128 : index
      %10 = vector.load %arg4[%9, %c0_15, %c128] : memref<4x3x2048xf32, #tpu.memory_space<vmem>>, vector<1x3x512xf32>
      tpu.vector_store %arg4[%9, %c0_15, %c128], %3 {strides = array<i32>} : memref<4x3x2048xf32, #tpu.memory_space<vmem>>, vector<1x3x512xf32>,
    }
    %c4_i32_7 = arith.constant 4 : i32
    %c0_8 = arith.constant 0 : index
    %c0_9 = arith.constant 0 : index
    %c0_10 = arith.constant 0 : index
    %5 = vector.load %arg3[%c0_8, %c0_9, %c0_10] : memref<4x3x1408xf32, #tpu.memory_space<vmem>>, vector<4x3x1408xf32>
    %c0_11 = arith.constant 0 : index
    %c0_12 = arith.constant 0 : index
    %c640 = arith.constant 640 : index
    %6 = vector.load %arg4[%c0_11, %c0_12, %c640] : memref<4x3x2048xf32, #tpu.memory_space<vmem>>, vector<4x3x1408xf32>
    tpu.vector_store %arg4[%c0_11, %c0_12, %c640], %5 {strides = array<i32>} : memref<4x3x2048xf32, #tpu.memory_space<vmem>>, vector<4x3x1408xf32>,
    return
  }
  func.func @transform_0(%arg0: i32) -> (i32, i32, i32) {
    %c0_i32 = arith.constant 0 : i32
    %c0_i32_0 = arith.constant 0 : i32
    %c0_i32_1 = arith.constant 0 : i32
    return %arg0, %c0_i32, %c0_i32_0 : i32, i32, i32
  }
  func.func @transform_1(%arg0: i32) -> (i32, i32) {
    %c0_i32 = arith.constant 0 : i32
    %c0_i32_0 = arith.constant 0 : i32
    %c0_i32_1 = arith.constant 0 : i32
    return %c0_i32, %c0_i32_0 : i32, i32
  }
  func.func @transform_2(%arg0: i32) -> (i32, i32, i32) {
    %c0_i32 = arith.constant 0 : i32
    %c0_i32_0 = arith.constant 0 : i32
    %c0_i32_1 = arith.constant 0 : i32
    return %arg0, %c0_i32, %c0_i32_0 : i32, i32, i32
  }
  func.func @transform_3(%arg0: i32) -> (i32, i32, i32) {
    %c0_i32 = arith.constant 0 : i32
    %c0_i32_0 = arith.constant 0 : i32
    %c0_i32_1 = arith.constant 0 : i32
    return %arg0, %c0_i32, %c0_i32_0 : i32, i32, i32
  }
}

</mosaic_0001>

<llo_original>
// kernel: tpu_custom_call.1
$region0: #{tpu_custom_call.1}
  #allocation0 [shape = 'u32[]', space=smem, size = 0x4, offset = 0x4, fixed_abs, tag = 'smem constant byte address 0x4 - core index']
  #allocation1 [shape = 'u32[144,128]{1,0:T(1,128)}', space=vmem, size = 0x12000, scoped, tag = 'internal scratch']
  %s0 = inlined_call_operand.vmem [shape: f32[8,3,128], index: 0, kind: input, shape index: {}]
  %s1 = inlined_call_operand.vmem [shape: f32[3,512], index: 1, kind: input, shape index: {}]
  %s2 = inlined_call_operand.vmem [shape: f32[8,3,1408], index: 2, kind: input, shape index: {}]
  %s3 = inlined_call_operand.vmem [shape: f32[8,3,2048], index: 3, kind: output, shape index: {}]
  %s4 = sld [smem:[#allocation0]]
  $region52: #{tpu_custom_call.1} parent=0
    _
  %s6 = ssub.s32 1, %s4
  %s7 = scalar_select 0, %s6, %s4
  loop: start=0, step=1, limit=4
  $region2: #{tpu_custom_call.1} parent=0 // loop_pre_header
    _
  $region3: #{tpu_custom_call.1} parent=0 // loop_header
    %s9 = sphi 0, %s13
    %p10 = scmp.ge.s32.totalorder %s9, 4
    %s19 = sphi 0, %s21
    %s22 = sphi 0, %s19
    %s23 = sphi 0, %s22
    %s39 = sphi 0, %s23
    %s43 = sphi 0, %s43
    %s45 = sphi 0, %s43
    %s46 = sphi 0, %s45
    %s60 = sphi 0, %s46
    %s66 = sphi 0, %s68
    %s69 = sphi 0, %s66
    %s70 = sphi 0, %s69
    %s86 = sphi 0, %s70
    %s92 = sphi 0, %s94
    %s95 = sphi 0, %s92
    %s96 = sphi 0, %s95
    %s112 = sphi 0, %s96
  $region4: #{tpu_custom_call.1} parent=0 // loop_header_branch
    %12 = sbr.rel (%p10) target = $region8
  $region5: #{tpu_custom_call.1} parent=0 // loop_body
    %s14 = ssub.s32 %s9, 1
    %s15 = ssub.s32 %s9, 2
    %s16 = sadd.s32 %s9, 1
    %s17 = ssub.s32 %s9, %s16
    %p18 = scmp.eq.s32.totalorder %s17, 0
    %s20 = sadd.s32 %s19, 1
    %s21 = scalar_select %p18, %s19, %s20
    %p24 = pneg %p18
    %p25 = scmp.eq.s32.totalorder %s9, 1
    %p26 = por %p24, %p25
    %p27 = scmp.ne.s32.totalorder %s19, %s22
    %p28 = scmp.eq.s32.totalorder %s9, 0
    %p29 = por %p27, %p28
    %p30 = scmp.ne.s32.totalorder %s19, %s22
    %p31 = scmp.eq.s32.totalorder %s14, 1
    %p32 = por %p30, %p31
    %p33 = scmp.ne.s32.totalorder %s22, %s23
    %p34 = scmp.eq.s32.totalorder %s14, 0
    %p35 = por %p33, %p34
    %p36 = scmp.ne.s32.totalorder %s22, %s23
    %p37 = scmp.eq.s32.totalorder %s15, 1
    %p38 = por %p36, %p37
    %p40 = scmp.ne.s32.totalorder %s23, %s39
    %p41 = scmp.eq.s32.totalorder %s15, 0
    %p42 = por %p40, %p41
    %s44 = sadd.s32 %s43, 1
    %p47 = scmp.eq.s32.totalorder %s9, 1
    %p48 = scmp.ne.s32.totalorder %s43, %s45
    %p49 = scmp.eq.s32.totalorder %s9, 0
    %p50 = por %p48, %p49
    %p51 = scmp.ne.s32.totalorder %s43, %s45
    %p52 = scmp.eq.s32.totalorder %s14, 1
    %p53 = por %p51, %p52
    %p54 = scmp.ne.s32.totalorder %s45, %s46
    %p55 = scmp.eq.s32.totalorder %s14, 0
    %p56 = por %p54, %p55
    %p57 = scmp.ne.s32.totalorder %s45, %s46
    %p58 = scmp.eq.s32.totalorder %s15, 1
    %p59 = por %p57, %p58
    %p61 = scmp.ne.s32.totalorder %s46, %s60
    %p62 = scmp.eq.s32.totalorder %s15, 0
    %p63 = por %p61, %p62
    %s64 = ssub.s32 %s9, %s16
    %p65 = scmp.eq.s32.totalorder %s64, 0
    %s67 = sadd.s32 %s66, 1
    %s68 = scalar_select %p65, %s66, %s67
    %p71 = pneg %p65
    %p72 = scmp.eq.s32.totalorder %s9, 1
    %p73 = por %p71, %p72
    %p74 = scmp.ne.s32.totalorder %s66, %s69
    %p75 = scmp.eq.s32.totalorder %s9, 0
    %p76 = por %p74, %p75
    %p77 = scmp.ne.s32.totalorder %s66, %s69
    %p78 = scmp.eq.s32.totalorder %s14, 1
    %p79 = por %p77, %p78
    %p80 = scmp.ne.s32.totalorder %s69, %s70
    %p81 = scmp.eq.s32.totalorder %s14, 0
    %p82 = por %p80, %p81
    %p83 = scmp.ne.s32.totalorder %s69, %s70
    %p84 = scmp.eq.s32.totalorder %s15, 1
    %p85 = por %p83, %p84
    %p87 = scmp.ne.s32.totalorder %s70, %s86
    %p88 = scmp.eq.s32.totalorder %s15, 0
    %p89 = por %p87, %p88
    %s90 = ssub.s32 %s9, %s16
    %p91 = scmp.eq.s32.totalorder %s90, 0
    %s93 = sadd.s32 %s92, 1
    %s94 = scalar_select %p91, %s92, %s93
    %p97 = pneg %p91
    %p98 = scmp.eq.s32.totalorder %s9, 1
    %p99 = por %p97, %p98
    %p100 = scmp.ne.s32.totalorder %s92, %s95
    %p101 = scmp.eq.s32.totalorder %s9, 0
    %p102 = por %p100, %p101
    %p103 = scmp.ne.s32.totalorder %s92, %s95
    %p104 = scmp.eq.s32.totalorder %s14, 1
    %p105 = por %p103, %p104
    %p106 = scmp.ne.s32.totalorder %s95, %s96
    %p107 = scmp.eq.s32.totalorder %s14, 0
    %p108 = por %p106, %p107
    %p109 = scmp.ne.s32.totalorder %s95, %s96
    %p110 = scmp.eq.s32.totalorder %s15, 1
    %p111 = por %p109, %p110
    %p113 = scmp.ne.s32.totalorder %s96, %s112
    %p114 = scmp.eq.s32.totalorder %s15, 0
    %p115 = por %p113, %p114
    %p116 = scmp.le.s32.totalorder 1, %s9
    %p117 = scmp.lt.s32.totalorder %s9, 3
    %p118 = pnand %p116, %p117
    %p119 = pneg %p118
    // Predicated region
    $region9: #{tpu_custom_call.1} parent=5 // pred_check
      _
    $region10: #{tpu_custom_call.1} parent=5 // pred_check_branch
      %121 = sbr.rel (%p118) target = $region12
    $region11: #{tpu_custom_call.1} parent=5 // pred_region
      %s122 = ssub.s32 %s9, 1
      // Predicated region
      $region13: #{tpu_custom_call.1} parent=11 // pred_check
        %p123 = pneg %p56
      $region14: #{tpu_custom_call.1} parent=11 // pred_check_branch
        %125 = sbr.rel (%p123) target = $region16
      $region15: #{tpu_custom_call.1} parent=11 // pred_region
        _
      $region16: #{tpu_custom_call.1} parent=11 // pred_fallthru
        _
    $region12: #{tpu_custom_call.1} parent=5 // pred_fallthru
      _
    %p126 = scmp.lt.s32.totalorder %s9, 2
    // Predicated region
    $region17: #{tpu_custom_call.1} parent=5 // pred_check
      %p127 = pneg %p126
    $region18: #{tpu_custom_call.1} parent=5 // pred_check_branch
      %129 = sbr.rel (%p127) target = $region20
    $region19: #{tpu_custom_call.1} parent=5 // pred_region
      // Predicated region
      $region21: #{tpu_custom_call.1} parent=19 // pred_check
        %p130 = pneg %p29
      $region22: #{tpu_custom_call.1} parent=19 // pred_check_branch
        %132 = sbr.rel (%p130) target = $region24
      $region23: #{tpu_custom_call.1} parent=19 // pred_region
        %s133 = smul.u32 4, %s9
        %p134 = scmp.lt.s32.totalorder %s133, 7
        %s135 = scalar_select %p134, %s133, 7
        %s136 = smul.addr %s135, 4
        %s137 = scalar_lea.vmem %s0, %s136
        %s138 = smul.u32 4, %s9
      $region24: #{tpu_custom_call.1} parent=19 // pred_fallthru
        _
      // Predicated region
      $region25: #{tpu_custom_call.1} parent=19 // pred_check
        %p139 = pneg %p76
      $region26: #{tpu_custom_call.1} parent=19 // pred_check_branch
        %141 = sbr.rel (%p139) target = $region28
      $region27: #{tpu_custom_call.1} parent=19 // pred_region
        %s142 = smul.u32 4, %s9
        %p143 = scmp.lt.s32.totalorder %s142, 7
        %s144 = scalar_select %p143, %s142, 7
        %s145 = smul.addr %s144, 11
        %s146 = smul.addr %s145, 4
        %s147 = scalar_lea.vmem %s2, %s146
        %s148 = smul.u32 4, %s9
      $region28: #{tpu_custom_call.1} parent=19 // pred_fallthru
        _
    $region20: #{tpu_custom_call.1} parent=5 // pred_fallthru
      _
    %p149 = scmp.le.s32.totalorder 1, %s9
    %p150 = scmp.lt.s32.totalorder %s9, 3
    %p151 = pnand %p149, %p150
    %p152 = pneg %p151
    // Predicated region
    $region29: #{tpu_custom_call.1} parent=5 // pred_check
      _
    $region30: #{tpu_custom_call.1} parent=5 // pred_check_branch
      %154 = sbr.rel (%p151) target = $region32
    $region31: #{tpu_custom_call.1} parent=5 // pred_region
      %s155 = ssub.s32 %s9, 1
      %s156 = smul.u32 4, %s14
      %p157 = scmp.lt.s32.totalorder %s156, 7
      %s158 = scalar_select %p157, %s156, 7
      %s159 = smul.addr %s158, 4
      %s160 = scalar_lea.vmem %s0, %s159
      %p161 = pneg %p35
      %p162 = pneg %p32
      %p163 = pneg %p56
      %p164 = pneg %p53
      %s165 = smul.u32 4, %s14
      %p166 = scmp.lt.s32.totalorder %s165, 7
      %s167 = scalar_select %p166, %s165, 7
      %s168 = smul.addr %s167, 11
      %s169 = smul.addr %s168, 4
      %s170 = scalar_lea.vmem %s2, %s169
      %p171 = pneg %p82
      %p172 = pneg %p79
      %p173 = pneg %p108
      %p174 = pneg %p105
      %s175 = smul.u32 4, %s14
      %p176 = scmp.lt.s32.totalorder %s175, 7
      %s177 = scalar_select %p176, %s175, 7
      %s178 = smul.addr %s177, 16
      %s179 = smul.addr %s178, 4
      %s180 = scalar_lea.vmem %s3, %s179
      %s181 = smul.u32 4, %s14
      %p182 = scmp.lt.s32.totalorder %s181, 7
      %s183 = scalar_select %p182, %s181, 7
      %s184 = smul.addr %s183, 4
      %s185 = scalar_lea.vmem %s0, %s184
      %s186 = smul.u32 4, %s14
      %s187 = smul.u32 4, %s14
      %p188 = scmp.lt.s32.totalorder %s187, 7
      %s189 = scalar_select %p188, %s187, 7
      %s190 = smul.addr %s189, 11
      %s191 = smul.addr %s190, 4
      %s192 = scalar_lea.vmem %s2, %s191
      %s193 = smul.u32 4, %s14
      %s194 = smul.u32 4, %s14
      %p195 = scmp.lt.s32.totalorder %s194, 7
      %s196 = scalar_select %p195, %s194, 7
      %s197 = smul.addr %s196, 16
      %s198 = smul.addr %s197, 4
      %s199 = scalar_lea.vmem %s3, %s198
      %s200 = smul.u32 4, %s14
      %v201 = vld [vmem:[%s185] sm:$0x7]
      %v202 = vld [vmem:[%s185 + $0x4] sm:$0x7]
      %v203 = vld [vmem:[%s185 + $0x8] sm:$0x7]
      %v204 = vld [vmem:[%s185 + $0xc] sm:$0x7]
      %205 = vst [vmem:[%s199] sm:$0x7] %v201
      %206 = vst [vmem:[%s199 + $0x40] sm:$0x7] %v202
      %207 = vst [vmem:[%s199 + $0x80] sm:$0x7] %v203
      %208 = vst [vmem:[%s199 + $0xc0] sm:$0x7] %v204
      %v209 = vld [vmem:[%s1] sm:$0x77]
      %v210 = vld [vmem:[%s1 + $0x8] sm:$0x77]
      loop: start=0, step=1, limit=4
      $region33: #{tpu_custom_call.1} parent=31 // loop_pre_header
        _
      $region34: #{tpu_custom_call.1} parent=31 // loop_header
        %s212 = sphi 0, %s216
        %p213 = scmp.ge.s32.totalorder %s212, 4
      $region35: #{tpu_custom_call.1} parent=31 // loop_header_branch
        %215 = sbr.rel (%p213) target = $region39
      $region36: #{tpu_custom_call.1} parent=31 // loop_body
        %s217 = smul.u32 %s212, 16
        %s218 = smul.addr %s217, 4
        %s219 = scalar_lea.vmem %s199, %s218
        %220 = vst [vmem:[%s219 + $0x4] sm:$0x77] %v209
        %221 = vst [vmem:[%s219 + $0xc] sm:$0x77] %v210
      $region37: #{tpu_custom_call.1} parent=31 // loop_footer
        %s216 = sadd.s32 1, %s212
      $region38: #{tpu_custom_call.1} parent=31 // loop_footer_branch
        %211 = sbr.rel target = $region34
      $region39: #{tpu_custom_call.1} parent=31 // loop_exit
        _
      %v222 = vld [vmem:[%s192] sm:$0x77]
      %v223 = vld [vmem:[%s192 + $0x8] sm:$0x77]
      %v224 = vld [vmem:[%s192 + $0x10] sm:$0x77]
      %v225 = vld [vmem:[%s192 + $0x18] sm:$0x77]
      %v226 = vld [vmem:[%s192 + $0x20] sm:$0x77]
      %v227 = vld [vmem:[%s192 + $0x28] sm:$0x7]
      %v228 = vld [vmem:[%s192 + $0x2c] sm:$0x77]
      %v229 = vld [vmem:[%s192 + $0x34] sm:$0x77]
      %v230 = vld [vmem:[%s192 + $0x3c] sm:$0x77]
      %v231 = vld [vmem:[%s192 + $0x44] sm:$0x77]
      %v232 = vld [vmem:[%s192 + $0x4c] sm:$0x77]
      %v233 = vld [vmem:[%s192 + $0x54] sm:$0x7]
      %v234 = vld [vmem:[%s192 + $0x58] sm:$0x77]
      %v235 = vld [vmem:[%s192 + $0x60] sm:$0x77]
      %v236 = vld [vmem:[%s192 + $0x68] sm:$0x77]
      %v237 = vld [vmem:[%s192 + $0x70] sm:$0x77]
      %v238 = vld [vmem:[%s192 + $0x78] sm:$0x77]
      %v239 = vld [vmem:[%s192 + $0x80] sm:$0x7]
      %v240 = vld [vmem:[%s192 + $0x84] sm:$0x77]
      %v241 = vld [vmem:[%s192 + $0x8c] sm:$0x77]
      %v242 = vld [vmem:[%s192 + $0x94] sm:$0x77]
      %v243 = vld [vmem:[%s192 + $0x9c] sm:$0x77]
      %v244 = vld [vmem:[%s192 + $0xa4] sm:$0x77]
      %v245 = vld [vmem:[%s192 + $0xac] sm:$0x7]
      %246 = vst [vmem:[%s199 + $0x14] sm:$0x77] %v222
      %247 = vst [vmem:[%s199 + $0x1c] sm:$0x77] %v223
      %248 = vst [vmem:[%s199 + $0x24] sm:$0x77] %v224
      %249 = vst [vmem:[%s199 + $0x2c] sm:$0x77] %v225
      %250 = vst [vmem:[%s199 + $0x34] sm:$0x77] %v226
      %251 = vst [vmem:[%s199 + $0x3c] sm:$0x7] %v227
      %252 = vst [vmem:[%s199 + $0x54] sm:$0x77] %v228
      %253 = vst [vmem:[%s199 + $0x5c] sm:$0x77] %v229
      %254 = vst [vmem:[%s199 + $0x64] sm:$0x77] %v230
      %255 = vst [vmem:[%s199 + $0x6c] sm:$0x77] %v231
      %256 = vst [vmem:[%s199 + $0x74] sm:$0x77] %v232
      %257 = vst [vmem:[%s199 + $0x7c] sm:$0x7] %v233
      %258 = vst [vmem:[%s199 + $0x94] sm:$0x77] %v234
      %259 = vst [vmem:[%s199 + $0x9c] sm:$0x77] %v235
      %260 = vst [vmem:[%s199 + $0xa4] sm:$0x77] %v236
      %261 = vst [vmem:[%s199 + $0xac] sm:$0x77] %v237
      %262 = vst [vmem:[%s199 + $0xb4] sm:$0x77] %v238
      %263 = vst [vmem:[%s199 + $0xbc] sm:$0x7] %v239
      %264 = vst [vmem:[%s199 + $0xd4] sm:$0x77] %v240
      %265 = vst [vmem:[%s199 + $0xdc] sm:$0x77] %v241
      %266 = vst [vmem:[%s199 + $0xe4] sm:$0x77] %v242
      %267 = vst [vmem:[%s199 + $0xec] sm:$0x77] %v243
      %268 = vst [vmem:[%s199 + $0xf4] sm:$0x77] %v244
      %269 = vst [vmem:[%s199 + $0xfc] sm:$0x7] %v245
      %s270 = smul.u32 4, %s14
      %p271 = scmp.lt.s32.totalorder %s270, 7
      %s272 = scalar_select %p271, %s270, 7
      %s273 = smul.addr %s272, 16
      %s274 = smul.addr %s273, 4
      %s275 = scalar_lea.vmem %s3, %s274
      // Predicated region
      $region40: #{tpu_custom_call.1} parent=31 // pred_check
        %p276 = pneg %p105
      $region41: #{tpu_custom_call.1} parent=31 // pred_check_branch
        %278 = sbr.rel (%p276) target = $region43
      $region42: #{tpu_custom_call.1} parent=31 // pred_region
        %s279 = smul.u32 4, %s14
      $region43: #{tpu_custom_call.1} parent=31 // pred_fallthru
        _
    $region32: #{tpu_custom_call.1} parent=5 // pred_fallthru
      _
    %p280 = scmp.le.s32.totalorder 2, %s9
    // Predicated region
    $region44: #{tpu_custom_call.1} parent=5 // pred_check
      %p281 = pneg %p280
    $region45: #{tpu_custom_call.1} parent=5 // pred_check_branch
      %283 = sbr.rel (%p281) target = $region47
    $region46: #{tpu_custom_call.1} parent=5 // pred_region
      %s284 = ssub.s32 %s9, 2
      // Predicated region
      $region48: #{tpu_custom_call.1} parent=46 // pred_check
        %p285 = pneg %p111
      $region49: #{tpu_custom_call.1} parent=46 // pred_check_branch
        %287 = sbr.rel (%p285) target = $region51
      $region50: #{tpu_custom_call.1} parent=46 // pred_region
        %s288 = smul.u32 4, %s15
        %p289 = scmp.lt.s32.totalorder %s288, 7
        %s290 = scalar_select %p289, %s288, 7
        %s291 = smul.addr %s290, 16
        %s292 = smul.addr %s291, 4
        %s293 = scalar_lea.vmem %s3, %s292
      $region51: #{tpu_custom_call.1} parent=46 // pred_fallthru
        _
    $region47: #{tpu_custom_call.1} parent=5 // pred_fallthru
      _
  $region6: #{tpu_custom_call.1} parent=0 // loop_footer
    %s13 = sadd.s32 1, %s9
  $region7: #{tpu_custom_call.1} parent=0 // loop_footer_branch
    %8 = sbr.rel target = $region3
  $region8: #{tpu_custom_call.1} parent=0 // loop_exit
    _

</llo_original>
